<compile_context>
chip_gen: v5e
topology: v5e:2x2
jax: 0.10.0
libtpu: 0.0.40
codegen_flags: <defaults>
</compile_context>

<pallas_src>
import jax
import jax.numpy as jnp
from jax import lax
from jax.experimental import pallas as pl
from jax.experimental.pallas import tpu as pltpu

# ----- problem sizes (small, consistent with the module's forward) -----------
B = 2                 # batch
C_IN = 3              # RGB-like input channels
H = W = 16            # spatial
HW = H * W            # 256
FEAT = 32             # base_model.num_features (synthetic; efficientnet_b5 would be 2048)
HIDDEN = 512          # fusion hidden dim (nn.Linear(feature_dim*3, 512))
NUM_CLASSES = 2
KH = KW = 3
NUM_BRANCHES = 3
K_IM2COL = KH * KW * C_IN            # 27
KPAD = 32                            # per-branch im2col K pad (27 -> 32)
FPAD = 128                           # fused lane-dense K/N (3*32 -> 128)
NCLS_PAD = 8                         # W2 output pad (full-array block; tiny masked store)
CHUNK = 128                          # conv M-chunk for streamed ReLU+GAP accumulation
assert HW % CHUNK == 0


# --------------------------- fused model kernel -------------------------------
def fused_dual_branch_kernel(patches_ref, cw_ref, cb_ref,
                             w1_ref, b1_ref, w2_ref, b2_ref, o_ref):
    """patches_ref: (B*H*W, FPAD) bf16  lane-concatenated im2col patches (3 branches)
       cw_ref:      (FPAD, FPAD)  bf16  block-diagonal conv weights
       cb_ref:      (1, FPAD)     f32   concatenated conv biases (pad lanes zero)
       w1_ref: (FPAD, HIDDEN) bf16 (rows 96..127 zero, 1/HW GAP scale folded in)
       b1_ref: (1, HIDDEN)    f32
       w2_ref: (HIDDEN, NCLS_PAD) bf16 (cols >= NUM_CLASSES zero)
       b2_ref: (1, NCLS_PAD)  f32
       o_ref:  (B, NCLS_PAD)  f32 logits (wrapper slices [:, :NUM_CLASSES])."""
    cw = cw_ref[...]                                   # (128, 128) bf16, stays in vregs
    cb = cb_ref[...]                                   # (1, 128)   f32

    # 3 branch convs == ONE block-diagonal 128x128 matmul, streamed over M chunks.
    # ReLU + global-average-pool accumulated per image; 1/HW folded into W1 -> use sum.
    feats = []
    for b in range(B):                                 # unrolled over batch (2)
        def body(c, acc, _b=b):
            start = pl.multiple_of(_b * HW + c * CHUNK, CHUNK)
            p = patches_ref[pl.ds(start, CHUNK), :]                       # (128, 128) bf16
            conv = jnp.dot(p, cw, preferred_element_type=jnp.float32)     # (128, 128) f32
            conv = jnp.maximum(conv + cb, 0.0)
            return acc + jnp.sum(conv, axis=0, keepdims=True)             # (1, 128)
        feats.append(lax.fori_loop(0, HW // CHUNK, body,
                                   jnp.zeros((1, FPAD), jnp.float32)))
    combined = jnp.concatenate(feats, axis=0)          # (B, 128): already "concatenated"
                                                       # branch features (pad lanes = 0)

    # fusion head: Linear(96->512) -> ReLU -> Dropout(id) -> Linear(512->num_classes)
    h = jnp.dot(combined.astype(jnp.bfloat16), w1_ref[...],
                preferred_element_type=jnp.float32) + b1_ref[...]          # (B, 512) f32
    h = jnp.maximum(h, 0.0)
    # TODO(synk): nn.Dropout(0.5) is identity in eval mode; training-mode mask not emitted.
    logits = jnp.dot(h.astype(jnp.bfloat16), w2_ref[...],
                     preferred_element_type=jnp.float32) + b2_ref[...]     # (B, 8) f32
    o_ref[...] = logits.astype(o_ref.dtype)


# ------------------------------ wrapper ---------------------------------------
def _im2col(x_nchw):
    """NCHW image -> (B*H*W, 27) im2col matrix for a 3x3 'same' conv (tap-major)."""
    x = jnp.transpose(x_nchw, (0, 2, 3, 1))                          # NCHW -> NHWC
    xp = jnp.pad(x, ((0, 0), (1, 1), (1, 1), (0, 0)))                # zero 'same' pad
    taps = [xp[:, dy:dy + H, dx:dx + W, :]
            for dy in range(KH) for dx in range(KW)]                 # 9 x (B,H,W,C_IN)
    p = jnp.concatenate(taps, axis=-1)                               # (B,H,W,27) tap-major
    return p.reshape(B * H * W, K_IM2COL)


def build_patches(x_spatial, x_freq, x_highfreq):
    """Lane-concatenated bf16 patches for the block-diagonal fused conv: (B*H*W, 128)."""
    blocks = []
    for x in (x_spatial, x_freq, x_highfreq):
        p = _im2col(x)                                               # (BHW, 27)
        blocks.append(jnp.pad(p, ((0, 0), (0, KPAD - K_IM2COL))))    # (BHW, 32)
    patches = jnp.concatenate(blocks, axis=1)                        # (BHW, 96)
    patches = jnp.pad(patches, ((0, 0), (0, FPAD - NUM_BRANCHES * KPAD)))
    return patches.astype(jnp.bfloat16)                              # (BHW, 128) bf16


def dual_branch_forward(params, x_spatial, x_freq, x_highfreq):
    patches = build_patches(x_spatial, x_freq, x_highfreq)           # (512, 128) bf16

    logits_padded = pl.pallas_call(
        fused_dual_branch_kernel,
        out_shape=jax.ShapeDtypeStruct((B, NCLS_PAD), jnp.float32),
        grid=(1,),
        in_specs=[
            pl.BlockSpec((B * H * W, FPAD), lambda i: (0, 0)),
            pl.BlockSpec((FPAD, FPAD), lambda i: (0, 0)),
            pl.BlockSpec((1, FPAD), lambda i: (0, 0)),
            pl.BlockSpec((FPAD, HIDDEN), lambda i: (0, 0)),
            pl.BlockSpec((1, HIDDEN), lambda i: (0, 0)),
            pl.BlockSpec((HIDDEN, NCLS_PAD), lambda i: (0, 0)),
            pl.BlockSpec((1, NCLS_PAD), lambda i: (0, 0)),
        ],
        out_specs=pl.BlockSpec((B, NCLS_PAD), lambda i: (0, 0)),
        compiler_params=pltpu.CompilerParams(
            dimension_semantics=("arbitrary",)),
    )(patches, params["conv_w"], params["conv_b"],
      params["w1"], params["b1"], params["w2"], params["b2"])

    return logits_padded[:, :NUM_CLASSES]                            # (B, NUM_CLASSES)


# ------------------------------ params ----------------------------------------
def init_params(key):
    ks = jax.random.split(key, 5)

    def winit(k, shape, fan_in):
        return jax.random.normal(k, shape, jnp.float32) / jnp.sqrt(fan_in)

    # Block-diagonal fused conv weight (128,128): branch i's (27,32) weight at
    # rows [i*32, i*32+27), cols [i*32, (i+1)*32); everything else zero.
    conv_w = jnp.zeros((FPAD, FPAD), jnp.float32)
    conv_b = jnp.zeros((1, FPAD), jnp.float32)
    for i in range(NUM_BRANCHES):
        w = winit(ks[i], (K_IM2COL, FEAT), K_IM2COL)
        conv_w = conv_w.at[i * KPAD:i * KPAD + K_IM2COL,
                           i * FEAT:(i + 1) * FEAT].set(w)
        conv_b = conv_b.at[0, i * FEAT:(i + 1) * FEAT].set(0.01 * (i + 1))
    conv_w = conv_w.astype(jnp.bfloat16)

    # Fusion Linear(96,512): fold the GAP 1/(H*W) scale into W1; pad K rows to 128.
    w1 = winit(ks[3], (NUM_BRANCHES * FEAT, HIDDEN), NUM_BRANCHES * FEAT) / float(HW)
    w1 = jnp.pad(w1, ((0, FPAD - NUM_BRANCHES * FEAT), (0, 0))).astype(jnp.bfloat16)
    b1 = 0.01 * jnp.ones((1, HIDDEN), jnp.float32)

    # Fusion Linear(512, num_classes): keep narrow (512, 8), no 128-wide zero pad.
    w2 = winit(ks[4], (HIDDEN, NUM_CLASSES), HIDDEN)
    w2 = jnp.pad(w2, ((0, 0), (0, NCLS_PAD - NUM_CLASSES))).astype(jnp.bfloat16)
    b2 = jnp.zeros((1, NCLS_PAD), jnp.float32)

    return {"conv_w": conv_w, "conv_b": conv_b,
            "w1": w1, "b1": b1, "w2": w2, "b2": b2}


# --------------------------- pure-JAX reference --------------------------------
def reference_forward(params, x_spatial, x_freq, x_highfreq):
    patches = build_patches(x_spatial, x_freq, x_highfreq).astype(jnp.float32)
    conv = jnp.maximum(patches @ params["conv_w"].astype(jnp.float32)
                       + params["conv_b"], 0.0)                       # (512, 128)
    combined = conv.reshape(B, HW, FPAD).sum(axis=1)                  # (B, 128)
    h = jnp.maximum(combined @ params["w1"].astype(jnp.float32) + params["b1"], 0.0)
    logits = h @ params["w2"].astype(jnp.float32) + params["b2"]
    return logits[:, :NUM_CLASSES]


if __name__ == "__main__":
    key = jax.random.PRNGKey(0)
    k_p, k_s, k_f, k_h = jax.random.split(key, 4)
    params = init_params(k_p)

    x_spatial = jax.random.normal(k_s, (B, C_IN, H, W), jnp.float32)   # NCHW
    x_freq = jax.random.normal(k_f, (B, C_IN, H, W), jnp.float32)      # NCHW
    x_highfreq = jax.random.normal(k_h, (B, C_IN, H, W), jnp.float32)  # NCHW

    out = jax.jit(dual_branch_forward)(params, x_spatial, x_freq, x_highfreq)
    out = jax.block_until_ready(out)

    assert out.shape == (B, NUM_CLASSES) and out.dtype == jnp.float32
    ref = reference_forward(params, x_spatial, x_freq, x_highfreq)
    assert bool(jnp.all(jnp.isfinite(out)))
    assert bool(jnp.allclose(out, ref, rtol=1e-1, atol=1e-1))          # bf16 MXU tolerance
    print("KERNEL_OK")
</pallas_src>

<mosaic_0001>
module attributes {stable_mosaic.version = 11 : i64} {
  func.func @fused_dual_branch_kernel(%arg0: i32, %arg1: memref<512x128xbf16, #tpu.memory_space<vmem>>, %arg2: memref<128x128xbf16, #tpu.memory_space<vmem>>, %arg3: memref<1x128xf32, #tpu.memory_space<vmem>>, %arg4: memref<128x512xbf16, #tpu.memory_space<vmem>>, %arg5: memref<1x512xf32, #tpu.memory_space<vmem>>, %arg6: memref<512x8xbf16, #tpu.memory_space<vmem>>, %arg7: memref<1x8xf32, #tpu.memory_space<vmem>>, %arg8: memref<2x8xf32, #tpu.memory_space<vmem>>) attributes {dimension_semantics = [#tpu.dimension_semantics<arbitrary>], iteration_bounds = array<i64: 1>, scalar_prefetch = 0 : i64, scratch_operands = 0 : i64, tpu.core_type = #tpu.core_type<tc>, window_params = [{pipeline_mode = #tpu.pipeline_mode<synchronous>, transform_indices = @transform_0, window_bounds = array<i64: 512, 128>}, {pipeline_mode = #tpu.pipeline_mode<synchronous>, transform_indices = @transform_1, window_bounds = array<i64: 128, 128>}, {pipeline_mode = #tpu.pipeline_mode<synchronous>, transform_indices = @transform_2, window_bounds = array<i64: 1, 128>}, {pipeline_mode = #tpu.pipeline_mode<synchronous>, transform_indices = @transform_3, window_bounds = array<i64: 128, 512>}, {pipeline_mode = #tpu.pipeline_mode<synchronous>, transform_indices = @transform_4, window_bounds = array<i64: 1, 512>}, {pipeline_mode = #tpu.pipeline_mode<synchronous>, transform_indices = @transform_5, window_bounds = array<i64: 512, 8>}, {pipeline_mode = #tpu.pipeline_mode<synchronous>, transform_indices = @transform_6, window_bounds = array<i64: 1, 8>}, {pipeline_mode = #tpu.pipeline_mode<synchronous>, transform_indices = @transform_7, window_bounds = array<i64: 2, 8>}]} {
    %c0 = arith.constant 0 : index
    %c0_0 = arith.constant 0 : index
    %0 = vector.load %arg2[%c0, %c0_0] : memref<128x128xbf16, #tpu.memory_space<vmem>>, vector<128x128xbf16>
    %c0_1 = arith.constant 0 : index
    %c0_2 = arith.constant 0 : index
    %1 = vector.load %arg3[%c0_1, %c0_2] : memref<1x128xf32, #tpu.memory_space<vmem>>, vector<1x128xf32>
    %cst = arith.constant 0.000000e+00 : f32
    %2 = vector.broadcast %cst : f32 to vector<1x128xf32>
    %c0_i32 = arith.constant 0 : i32
    %c2_i32 = arith.constant 2 : i32
    %3 = arith.addi %c0_i32, %c2_i32 : i32
    %c1_i32 = arith.constant 1 : i32
    %4 = scf.for %arg9 = %c0_i32 to %3 step %c1_i32 iter_args(%arg10 = %2) -> (vector<1x128xf32>)  : i32 {
      %c128_i32 = arith.constant 128 : i32
      %24 = arith.muli %arg9, %c128_i32 : i32
      %c0_i32_22 = arith.constant 0 : i32
      %25 = arith.addi %c0_i32_22, %24 : i32
      %26 = tpu.assume_multiple %25, 128 : i32
      %27 = arith.index_cast %26 : i32 to index
      %c0_23 = arith.constant 0 : index
      %28 = vector.load %arg1[%27, %c0_23] : memref<512x128xbf16, #tpu.memory_space<vmem>>, vector<128x128xbf16>
      %cst_24 = arith.constant dense<0.000000e+00> : vector<128x128xf32>
      %29 = tpu.matmul %28, %0, %cst_24 {dimension_numbers = #tpu.dot_dimension_numbers<[1], [0], [0], [1], [0, 0, 1, 1], [], []>} : vector<128x128xbf16>, vector<128x128xbf16>, vector<128x128xf32> -> vector<128x128xf32>
      %30 = vector.broadcast %1 : vector<1x128xf32> to vector<128x128xf32>
      %31 = arith.addf %29, %30 : vector<128x128xf32>
      %cst_25 = arith.constant 0.000000e+00 : f32
      %32 = vector.broadcast %cst_25 : f32 to vector<128x128xf32>
      %33 = arith.maximumf %31, %32 : vector<128x128xf32>
      %cst_26 = arith.constant dense<0.000000e+00> : vector<128xf32>
      %34 = vector.multi_reduction <add>, %33, %cst_26 [0] : vector<128x128xf32> to vector<128xf32>
      %35 = vector.shape_cast %34 : vector<128xf32> to vector<1x128xf32>
      %36 = arith.addf %arg10, %35 : vector<1x128xf32>
      scf.yield %36 : vector<1x128xf32>
    }
    %c2_i32_3 = arith.constant 2 : i32
    %cst_4 = arith.constant 0.000000e+00 : f32
    %5 = vector.broadcast %cst_4 : f32 to vector<1x128xf32>
    %c0_i32_5 = arith.constant 0 : i32
    %c2_i32_6 = arith.constant 2 : i32
    %6 = arith.addi %c0_i32_5, %c2_i32_6 : i32
    %c1_i32_7 = arith.constant 1 : i32
    %7 = scf.for %arg9 = %c0_i32_5 to %6 step %c1_i32_7 iter_args(%arg10 = %5) -> (vector<1x128xf32>)  : i32 {
      %c128_i32 = arith.constant 128 : i32
      %24 = arith.muli %arg9, %c128_i32 : i32
      %c256_i32 = arith.constant 256 : i32
      %25 = arith.addi %c256_i32, %24 : i32
      %26 = tpu.assume_multiple %25, 128 : i32
      %27 = arith.index_cast %26 : i32 to index
      %c0_22 = arith.constant 0 : index
      %28 = vector.load %arg1[%27, %c0_22] : memref<512x128xbf16, #tpu.memory_space<vmem>>, vector<128x128xbf16>
      %cst_23 = arith.constant dense<0.000000e+00> : vector<128x128xf32>
      %29 = tpu.matmul %28, %0, %cst_23 {dimension_numbers = #tpu.dot_dimension_numbers<[1], [0], [0], [1], [0, 0, 1, 1], [], []>} : vector<128x128xbf16>, vector<128x128xbf16>, vector<128x128xf32> -> vector<128x128xf32>
      %30 = vector.broadcast %1 : vector<1x128xf32> to vector<128x128xf32>
      %31 = arith.addf %29, %30 : vector<128x128xf32>
      %cst_24 = arith.constant 0.000000e+00 : f32
      %32 = vector.broadcast %cst_24 : f32 to vector<128x128xf32>
      %33 = arith.maximumf %31, %32 : vector<128x128xf32>
      %cst_25 = arith.constant dense<0.000000e+00> : vector<128xf32>
      %34 = vector.multi_reduction <add>, %33, %cst_25 [0] : vector<128x128xf32> to vector<128xf32>
      %35 = vector.shape_cast %34 : vector<128xf32> to vector<1x128xf32>
      %36 = arith.addf %arg10, %35 : vector<1x128xf32>
      scf.yield %36 : vector<1x128xf32>
    }
    %c2_i32_8 = arith.constant 2 : i32
    %8 = tpu.concatenate %4, %7 in 0 : vector<1x128xf32>, vector<1x128xf32> -> vector<2x128xf32>
    %9 = arith.truncf %8 : vector<2x128xf32> to vector<2x128xbf16>
    %c0_9 = arith.constant 0 : index
    %c0_10 = arith.constant 0 : index
    %10 = vector.load %arg4[%c0_9, %c0_10] : memref<128x512xbf16, #tpu.memory_space<vmem>>, vector<128x512xbf16>
    %cst_11 = arith.constant dense<0.000000e+00> : vector<2x512xf32>
    %11 = tpu.matmul %9, %10, %cst_11 {dimension_numbers = #tpu.dot_dimension_numbers<[1], [0], [0], [1], [0, 0, 1, 1], [], []>} : vector<2x128xbf16>, vector<128x512xbf16>, vector<2x512xf32> -> vector<2x512xf32>
    %c0_12 = arith.constant 0 : index
    %c0_13 = arith.constant 0 : index
    %12 = vector.load %arg5[%c0_12, %c0_13] : memref<1x512xf32, #tpu.memory_space<vmem>>, vector<1x512xf32>
    %13 = vector.broadcast %12 : vector<1x512xf32> to vector<2x512xf32>
    %14 = arith.addf %11, %13 : vector<2x512xf32>
    %cst_14 = arith.constant 0.000000e+00 : f32
    %15 = vector.broadcast %cst_14 : f32 to vector<2x512xf32>
    %16 = arith.maximumf %14, %15 : vector<2x512xf32>
    %17 = arith.truncf %16 : vector<2x512xf32> to vector<2x512xbf16>
    %c0_15 = arith.constant 0 : index
    %c0_16 = arith.constant 0 : index
    %18 = vector.load %arg6[%c0_15, %c0_16] : memref<512x8xbf16, #tpu.memory_space<vmem>>, vector<512x8xbf16>
    %cst_17 = arith.constant dense<0.000000e+00> : vector<2x8xf32>
    %19 = tpu.matmul %17, %18, %cst_17 {dimension_numbers = #tpu.dot_dimension_numbers<[1], [0], [0], [1], [0, 0, 1, 1], [], []>} : vector<2x512xbf16>, vector<512x8xbf16>, vector<2x8xf32> -> vector<2x8xf32>
    %c0_18 = arith.constant 0 : index
    %c0_19 = arith.constant 0 : index
    %20 = vector.load %arg7[%c0_18, %c0_19] : memref<1x8xf32, #tpu.memory_space<vmem>>, vector<1x8xf32>
    %21 = vector.broadcast %20 : vector<1x8xf32> to vector<2x8xf32>
    %22 = arith.addf %19, %21 : vector<2x8xf32>
    %c0_20 = arith.constant 0 : index
    %c0_21 = arith.constant 0 : index
    %23 = vector.load %arg8[%c0_20, %c0_21] : memref<2x8xf32, #tpu.memory_space<vmem>>, vector<2x8xf32>
    tpu.vector_store %arg8[%c0_20, %c0_21], %22 {strides = array<i32>} : memref<2x8xf32, #tpu.memory_space<vmem>>, vector<2x8xf32>,
    return
  }
  func.func @transform_0(%arg0: i32) -> (i32, i32) {
    %c0_i32 = arith.constant 0 : i32
    %c0_i32_0 = arith.constant 0 : i32
    %c0_i32_1 = arith.constant 0 : i32
    return %c0_i32, %c0_i32_0 : i32, i32
  }
  func.func @transform_1(%arg0: i32) -> (i32, i32) {
    %c0_i32 = arith.constant 0 : i32
    %c0_i32_0 = arith.constant 0 : i32
    %c0_i32_1 = arith.constant 0 : i32
    return %c0_i32, %c0_i32_0 : i32, i32
  }
  func.func @transform_2(%arg0: i32) -> (i32, i32) {
    %c0_i32 = arith.constant 0 : i32
    %c0_i32_0 = arith.constant 0 : i32
    %c0_i32_1 = arith.constant 0 : i32
    return %c0_i32, %c0_i32_0 : i32, i32
  }
  func.func @transform_3(%arg0: i32) -> (i32, i32) {
    %c0_i32 = arith.constant 0 : i32
    %c0_i32_0 = arith.constant 0 : i32
    %c0_i32_1 = arith.constant 0 : i32
    return %c0_i32, %c0_i32_0 : i32, i32
  }
  func.func @transform_4(%arg0: i32) -> (i32, i32) {
    %c0_i32 = arith.constant 0 : i32
    %c0_i32_0 = arith.constant 0 : i32
    %c0_i32_1 = arith.constant 0 : i32
    return %c0_i32, %c0_i32_0 : i32, i32
  }
  func.func @transform_5(%arg0: i32) -> (i32, i32) {
    %c0_i32 = arith.constant 0 : i32
    %c0_i32_0 = arith.constant 0 : i32
    %c0_i32_1 = arith.constant 0 : i32
    return %c0_i32, %c0_i32_0 : i32, i32
  }
  func.func @transform_6(%arg0: i32) -> (i32, i32) {
    %c0_i32 = arith.constant 0 : i32
    %c0_i32_0 = arith.constant 0 : i32
    %c0_i32_1 = arith.constant 0 : i32
    return %c0_i32, %c0_i32_0 : i32, i32
  }
  func.func @transform_7(%arg0: i32) -> (i32, i32) {
    %c0_i32 = arith.constant 0 : i32
    %c0_i32_0 = arith.constant 0 : i32
    %c0_i32_1 = arith.constant 0 : i32
    return %c0_i32, %c0_i32_0 : i32, i32
  }
}

</mosaic_0001>

<llo_original>
// kernel: dual_branch_forward.1
$region0: #{dual_branch_forward.1}
  #allocation0 [shape = 'u32[]', space=smem, size = 0x4, offset = 0x4, fixed_abs, tag = 'smem constant byte address 0x4 - core index']
  #allocation1 [shape = 'u32[72,128]{1,0:T(1,128)}', space=vmem, size = 0x9000, scoped, tag = 'internal scratch']
  %s0 = inlined_call_operand.vmem [shape: bf16[512,128], index: 0, kind: input, shape index: {}]
  %s1 = inlined_call_operand.vmem [shape: bf16[128,128], index: 1, kind: input, shape index: {}]
  %s2 = inlined_call_operand.vmem [shape: f32[1,128], index: 2, kind: input, shape index: {}]
  %s3 = inlined_call_operand.vmem [shape: bf16[128,512], index: 3, kind: input, shape index: {}]
  %s4 = inlined_call_operand.vmem [shape: f32[1,512], index: 4, kind: input, shape index: {}]
  %s5 = inlined_call_operand.vmem [shape: bf16[512,8], index: 5, kind: input, shape index: {}]
  %s6 = inlined_call_operand.vmem [shape: f32[1,8], index: 6, kind: input, shape index: {}]
  %s7 = inlined_call_operand.hbm [shape: f32[2,8], index: 7, kind: output, shape index: {}]
  %s8 = sld [smem:[#allocation0]]
  $region52: #{dual_branch_forward.1} parent=0
    _
  %s10 = ssub.s32 1, %s8
  %s11 = scalar_select 0, %s10, %s8
  $region1: #{dual_branch_forward.1} parent=0
    #allocation2 [shape = 'u8[1024]{0}', space=vmem, size = 0x400, scoped, tag = 'output window, operand 0, single buffered']
    #allocation3 [shape = 's32[1]{0}', space=sflag, size = 0x4, scoped, tag = 'scoped memory for dual_branch_forward.1']
    %12 = vsyncpa [#allocation3], 0
    // Predicated region
    $region2: #{dual_branch_forward.1} parent=1 // pred_check
      _
    $region3: #{dual_branch_forward.1} parent=1 // pred_check_branch
      %14 = sbr.rel (0) target = $region5
    $region4: #{dual_branch_forward.1} parent=1 // pred_region
      _
    $region5: #{dual_branch_forward.1} parent=1 // pred_fallthru
      _
    // Predicated region
    $region6: #{dual_branch_forward.1} parent=1 // pred_check
      _
    $region7: #{dual_branch_forward.1} parent=1 // pred_check_branch
      %16 = sbr.rel (0) target = $region9
    $region8: #{dual_branch_forward.1} parent=1 // pred_region
      _
    $region9: #{dual_branch_forward.1} parent=1 // pred_fallthru
      _
    // Predicated region
    $region10: #{dual_branch_forward.1} parent=1 // pred_check
      _
    $region11: #{dual_branch_forward.1} parent=1 // pred_check_branch
      %18 = sbr.rel (0) target = $region13
    $region12: #{dual_branch_forward.1} parent=1 // pred_region
      _
    $region13: #{dual_branch_forward.1} parent=1 // pred_fallthru
      _
    // Predicated region
    $region14: #{dual_branch_forward.1} parent=1 // pred_check
      _
    $region15: #{dual_branch_forward.1} parent=1 // pred_check_branch
      %20 = sbr.rel (0) target = $region17
    $region16: #{dual_branch_forward.1} parent=1 // pred_region
      _
    $region17: #{dual_branch_forward.1} parent=1 // pred_fallthru
      _
    // Predicated region
    $region18: #{dual_branch_forward.1} parent=1 // pred_check
      _
    $region19: #{dual_branch_forward.1} parent=1 // pred_check_branch
      %22 = sbr.rel (0) target = $region21
    $region20: #{dual_branch_forward.1} parent=1 // pred_region
      _
    $region21: #{dual_branch_forward.1} parent=1 // pred_fallthru
      _
    // Predicated region
    $region22: #{dual_branch_forward.1} parent=1 // pred_check
      _
    $region23: #{dual_branch_forward.1} parent=1 // pred_check_branch
      %24 = sbr.rel (0) target = $region25
    $region24: #{dual_branch_forward.1} parent=1 // pred_region
      _
    $region25: #{dual_branch_forward.1} parent=1 // pred_fallthru
      _
    // Predicated region
    $region26: #{dual_branch_forward.1} parent=1 // pred_check
      _
    $region27: #{dual_branch_forward.1} parent=1 // pred_check_branch
      %26 = sbr.rel (0) target = $region29
    $region28: #{dual_branch_forward.1} parent=1 // pred_region
      _
    $region29: #{dual_branch_forward.1} parent=1 // pred_fallthru
      _
    %v27 = vld [vmem:[%s1] sm:$0xf]
    %v28 = vld [vmem:[%s1 + $0x4] sm:$0xf]
    %v29 = vld [vmem:[%s1 + $0x8] sm:$0xf]
    %v30 = vld [vmem:[%s1 + $0xc] sm:$0xf]
    %v31 = vld [vmem:[%s1 + $0x10] sm:$0xf]
    %v32 = vld [vmem:[%s1 + $0x14] sm:$0xf]
    %v33 = vld [vmem:[%s1 + $0x18] sm:$0xf]
    %v34 = vld [vmem:[%s1 + $0x1c] sm:$0xf]
    %v35 = vld [vmem:[%s1 + $0x20] sm:$0xf]
    %v36 = vld [vmem:[%s1 + $0x24] sm:$0xf]
    %v37 = vld [vmem:[%s1 + $0x28] sm:$0xf]
    %v38 = vld [vmem:[%s1 + $0x2c] sm:$0xf]
    %v39 = vld [vmem:[%s1 + $0x30] sm:$0xf]
    %v40 = vld [vmem:[%s1 + $0x34] sm:$0xf]
    %v41 = vld [vmem:[%s1 + $0x38] sm:$0xf]
    %v42 = vld [vmem:[%s1 + $0x3c] sm:$0xf]
    %v43 = vld [vmem:[%s2] sm:$0x1]
    loop: start=0, step=1, limit=2
    $region30: #{dual_branch_forward.1} parent=1 // loop_pre_header
      _
    $region31: #{dual_branch_forward.1} parent=1 // loop_header
      %s45 = sphi 0, %s49
      %p46 = scmp.ge.s32.totalorder %s45, 2
      %v50 = vphi 0.0, %v257
    $region32: #{dual_branch_forward.1} parent=1 // loop_header_branch
      %48 = sbr.rel (%p46) target = $region36
    $region33: #{dual_branch_forward.1} parent=1 // loop_body
      %s51 = smul.u32 %s45, 128
      %s52 = sshra.s32 %s51, 3
      %s53 = sand.u32 %s51, 7
      %s54 = smul.addr %s52, 4
      %s55 = scalar_lea.vmem %s0, %s54
      %v56 = vld [vmem:[%s55] sm:$0xf]
      %v57 = vld [vmem:[%s55 + $0x4] sm:$0xf]
      %v58 = vld [vmem:[%s55 + $0x8] sm:$0xf]
      %v59 = vld [vmem:[%s55 + $0xc] sm:$0xf]
      %v60 = vld [vmem:[%s55 + $0x10] sm:$0xf]
      %v61 = vld [vmem:[%s55 + $0x14] sm:$0xf]
      %v62 = vld [vmem:[%s55 + $0x18] sm:$0xf]
      %v63 = vld [vmem:[%s55 + $0x1c] sm:$0xf]
      %v64 = vld [vmem:[%s55 + $0x20] sm:$0xf]
      %v65 = vld [vmem:[%s55 + $0x24] sm:$0xf]
      %v66 = vld [vmem:[%s55 + $0x28] sm:$0xf]
      %v67 = vld [vmem:[%s55 + $0x2c] sm:$0xf]
      %v68 = vld [vmem:[%s55 + $0x30] sm:$0xf]
      %v69 = vld [vmem:[%s55 + $0x34] sm:$0xf]
      %v70 = vld [vmem:[%s55 + $0x38] sm:$0xf]
      %v71 = vld [vmem:[%s55 + $0x3c] sm:$0xf]
      %v73 = vperm.slane %v43, 0
      %v91 = vunpack.c.l.b16 %v56
      %v92 = vunpack.c.l.b16 %v57
      %v93 = vunpack.c.l.b16 %v58
      %v94 = vunpack.c.l.b16 %v59
      %v95 = vunpack.c.l.b16 %v60
      %v96 = vunpack.c.l.b16 %v61
      %v97 = vunpack.c.l.b16 %v62
      %v98 = vunpack.c.l.b16 %v63
      %v99 = vunpack.c.l.b16 %v64
      %v100 = vunpack.c.l.b16 %v65
      %v101 = vunpack.c.l.b16 %v66
      %v102 = vunpack.c.l.b16 %v67
      %v103 = vunpack.c.l.b16 %v68
      %v104 = vunpack.c.l.b16 %v69
      %v105 = vunpack.c.l.b16 %v70
      %v106 = vunpack.c.l.b16 %v71
      %v107 = vpack.c.b16 %v92, %v91
      %v108 = vpack.c.b16 %v94, %v93
      %v109 = vpack.c.b16 %v96, %v95
      %v110 = vpack.c.b16 %v98, %v97
      %v111 = vpack.c.b16 %v100, %v99
      %v112 = vpack.c.b16 %v102, %v101
      %v113 = vpack.c.b16 %v104, %v103
      %v114 = vpack.c.b16 %v106, %v105
      %v139 = vunpack.c.l.b16 %v27
      %v140 = vunpack.c.l.b16 %v28
      %v141 = vunpack.c.l.b16 %v29
      %v142 = vunpack.c.l.b16 %v30
      %v143 = vunpack.c.l.b16 %v31
      %v144 = vunpack.c.l.b16 %v32
      %v145 = vunpack.c.l.b16 %v33
      %v146 = vunpack.c.l.b16 %v34
      %v147 = vunpack.c.l.b16 %v35
      %v148 = vunpack.c.l.b16 %v36
      %v149 = vunpack.c.l.b16 %v37
      %v150 = vunpack.c.l.b16 %v38
      %v151 = vunpack.c.l.b16 %v39
      %v152 = vunpack.c.l.b16 %v40
      %v153 = vunpack.c.l.b16 %v41
      %v154 = vunpack.c.l.b16 %v42
      %v155 = vpack.c.b16 %v140, %v139
      %v156 = vpack.c.b16 %v142, %v141
      %v157 = vpack.c.b16 %v144, %v143
      %v158 = vpack.c.b16 %v146, %v145
      %v159 = vpack.c.b16 %v148, %v147
      %v160 = vpack.c.b16 %v150, %v149
      %v161 = vpack.c.b16 %v152, %v151
      %v162 = vpack.c.b16 %v154, %v153
      %171 = vmatpush.bf16.msra.mxu0 %v162
      %172 = vmatpush.bf16.msra.mxu0 %v161
      %173 = vmatpush.bf16.msra.mxu0 %v160
      %174 = vmatpush.bf16.msra.mxu0 %v159
      %175 = vmatpush.bf16.msra.mxu0 %v158
      %176 = vmatpush.bf16.msra.mxu0 %v157
      %177 = vmatpush.bf16.msra.mxu0 %v156
      %178 = vmatpush.bf16.msra.mxu0 %v155
      %179 = vmatmul.bf16.gmra.mxu0 %v107
      %v180 = vpop.f32.mrf.mxu0
      %v181 = vadd.f32 %v73, %v180
      %v182 = vpop.f32.mrf.mxu0
      %v183 = vadd.f32 %v73, %v182
      %184 = vmatmul.bf16.gmra.mxu0 %v108
      %v185 = vpop.f32.mrf.mxu0
      %v186 = vadd.f32 %v73, %v185
      %v187 = vpop.f32.mrf.mxu0
      %v188 = vadd.f32 %v73, %v187
      %189 = vmatmul.bf16.gmra.mxu0 %v109
      %v190 = vpop.f32.mrf.mxu0
      %v191 = vadd.f32 %v73, %v190
      %v192 = vpop.f32.mrf.mxu0
      %v193 = vadd.f32 %v73, %v192
      %194 = vmatmul.bf16.gmra.mxu0 %v110
      %v195 = vpop.f32.mrf.mxu0
      %v196 = vadd.f32 %v73, %v195
      %v197 = vpop.f32.mrf.mxu0
      %v198 = vadd.f32 %v73, %v197
      %199 = vmatmul.bf16.gmra.mxu0 %v111
      %v200 = vpop.f32.mrf.mxu0
      %v201 = vadd.f32 %v73, %v200
      %v202 = vpop.f32.mrf.mxu0
      %v203 = vadd.f32 %v73, %v202
      %204 = vmatmul.bf16.gmra.mxu0 %v112
      %v205 = vpop.f32.mrf.mxu0
      %v206 = vadd.f32 %v73, %v205
      %v207 = vpop.f32.mrf.mxu0
      %v208 = vadd.f32 %v73, %v207
      %209 = vmatmul.bf16.gmra.mxu0 %v113
      %v210 = vpop.f32.mrf.mxu0
      %v211 = vadd.f32 %v73, %v210
      %v212 = vpop.f32.mrf.mxu0
      %v213 = vadd.f32 %v73, %v212
      %214 = vmatmul.bf16.gmra.mxu0 %v114
      %v215 = vpop.f32.mrf.mxu0
      %v216 = vadd.f32 %v73, %v215
      %v217 = vpop.f32.mrf.mxu0
      %v218 = vadd.f32 %v73, %v217
      %219 = vdwg.mxu0
      %v220 = vmax.f32 %v181, 0.0
      %v221 = vmax.f32 %v183, 0.0
      %v222 = vmax.f32 %v186, 0.0
      %v223 = vmax.f32 %v188, 0.0
      %v224 = vmax.f32 %v191, 0.0
      %v225 = vmax.f32 %v193, 0.0
      %v226 = vmax.f32 %v196, 0.0
      %v227 = vmax.f32 %v198, 0.0
      %v228 = vmax.f32 %v201, 0.0
      %v229 = vmax.f32 %v203, 0.0
      %v230 = vmax.f32 %v206, 0.0
      %v231 = vmax.f32 %v208, 0.0
      %v232 = vmax.f32 %v211, 0.0
      %v233 = vmax.f32 %v213, 0.0
      %v234 = vmax.f32 %v216, 0.0
      %v235 = vmax.f32 %v218, 0.0
      %v236 = vadd.f32 %v220, %v221
      %v237 = vadd.f32 %v236, %v222
      %v238 = vadd.f32 %v237, %v223
      %v239 = vadd.f32 %v238, %v224
      %v240 = vadd.f32 %v239, %v225
      %v241 = vadd.f32 %v240, %v226
      %v242 = vadd.f32 %v241, %v227
      %v243 = vadd.f32 %v242, %v228
      %v244 = vadd.f32 %v243, %v229
      %v245 = vadd.f32 %v244, %v230
      %v246 = vadd.f32 %v245, %v231
      %v247 = vadd.f32 %v246, %v232
      %v248 = vadd.f32 %v247, %v233
      %v249 = vadd.f32 %v248, %v234
      %v250 = vadd.f32 %v249, %v235
      %v251 = vrot.slane %v250, 4
      %v252 = vadd.f32 %v250, %v251
      %v253 = vrot.slane %v252, 2
      %v254 = vadd.f32 %v252, %v253
      %v255 = vrot.slane %v254, 1
      %v256 = vadd.f32 %v254, %v255
      %v257 = vadd.f32 %v50, %v256
    $region34: #{dual_branch_forward.1} parent=1 // loop_footer
      %s49 = sadd.s32 1, %s45
    $region35: #{dual_branch_forward.1} parent=1 // loop_footer_branch
      %44 = sbr.rel target = $region31
    $region36: #{dual_branch_forward.1} parent=1 // loop_exit
      _
    loop: start=0, step=1, limit=2
    $region37: #{dual_branch_forward.1} parent=1 // loop_pre_header
      _
    $region38: #{dual_branch_forward.1} parent=1 // loop_header
      %s259 = sphi 0, %s263
      %p260 = scmp.ge.s32.totalorder %s259, 2
      %v264 = vphi 0.0, %v472
    $region39: #{dual_branch_forward.1} parent=1 // loop_header_branch
      %262 = sbr.rel (%p260) target = $region43
    $region40: #{dual_branch_forward.1} parent=1 // loop_body
      %s265 = smul.u32 %s259, 128
      %s266 = sadd.s32 %s265, 256
      %s267 = sshra.s32 %s266, 3
      %s268 = sand.u32 %s266, 7
      %s269 = smul.addr %s267, 4
      %s270 = scalar_lea.vmem %s0, %s269
      %v271 = vld [vmem:[%s270] sm:$0xf]
      %v272 = vld [vmem:[%s270 + $0x4] sm:$0xf]
      %v273 = vld [vmem:[%s270 + $0x8] sm:$0xf]
      %v274 = vld [vmem:[%s270 + $0xc] sm:$0xf]
      %v275 = vld [vmem:[%s270 + $0x10] sm:$0xf]
      %v276 = vld [vmem:[%s270 + $0x14] sm:$0xf]
      %v277 = vld [vmem:[%s270 + $0x18] sm:$0xf]
      %v278 = vld [vmem:[%s270 + $0x1c] sm:$0xf]
      %v279 = vld [vmem:[%s270 + $0x20] sm:$0xf]
      %v280 = vld [vmem:[%s270 + $0x24] sm:$0xf]
      %v281 = vld [vmem:[%s270 + $0x28] sm:$0xf]
      %v282 = vld [vmem:[%s270 + $0x2c] sm:$0xf]
      %v283 = vld [vmem:[%s270 + $0x30] sm:$0xf]
      %v284 = vld [vmem:[%s270 + $0x34] sm:$0xf]
      %v285 = vld [vmem:[%s270 + $0x38] sm:$0xf]
      %v286 = vld [vmem:[%s270 + $0x3c] sm:$0xf]
      %v288 = vperm.slane %v43, 0
      %v306 = vunpack.c.l.b16 %v271
      %v307 = vunpack.c.l.b16 %v272
      %v308 = vunpack.c.l.b16 %v273
      %v309 = vunpack.c.l.b16 %v274
      %v310 = vunpack.c.l.b16 %v275
      %v311 = vunpack.c.l.b16 %v276
      %v312 = vunpack.c.l.b16 %v277
      %v313 = vunpack.c.l.b16 %v278
      %v314 = vunpack.c.l.b16 %v279
      %v315 = vunpack.c.l.b16 %v280
      %v316 = vunpack.c.l.b16 %v281
      %v317 = vunpack.c.l.b16 %v282
      %v318 = vunpack.c.l.b16 %v283
      %v319 = vunpack.c.l.b16 %v284
      %v320 = vunpack.c.l.b16 %v285
      %v321 = vunpack.c.l.b16 %v286
      %v322 = vpack.c.b16 %v307, %v306
      %v323 = vpack.c.b16 %v309, %v308
      %v324 = vpack.c.b16 %v311, %v310
      %v325 = vpack.c.b16 %v313, %v312
      %v326 = vpack.c.b16 %v315, %v314
      %v327 = vpack.c.b16 %v317, %v316
      %v328 = vpack.c.b16 %v319, %v318
      %v329 = vpack.c.b16 %v321, %v320
      %v354 = vunpack.c.l.b16 %v27
      %v355 = vunpack.c.l.b16 %v28
      %v356 = vunpack.c.l.b16 %v29
      %v357 = vunpack.c.l.b16 %v30
      %v358 = vunpack.c.l.b16 %v31
      %v359 = vunpack.c.l.b16 %v32
      %v360 = vunpack.c.l.b16 %v33
      %v361 = vunpack.c.l.b16 %v34
      %v362 = vunpack.c.l.b16 %v35
      %v363 = vunpack.c.l.b16 %v36
      %v364 = vunpack.c.l.b16 %v37
      %v365 = vunpack.c.l.b16 %v38
      %v366 = vunpack.c.l.b16 %v39
      %v367 = vunpack.c.l.b16 %v40
      %v368 = vunpack.c.l.b16 %v41
      %v369 = vunpack.c.l.b16 %v42
      %v370 = vpack.c.b16 %v355, %v354
      %v371 = vpack.c.b16 %v357, %v356
      %v372 = vpack.c.b16 %v359, %v358
      %v373 = vpack.c.b16 %v361, %v360
      %v374 = vpack.c.b16 %v363, %v362
      %v375 = vpack.c.b16 %v365, %v364
      %v376 = vpack.c.b16 %v367, %v366
      %v377 = vpack.c.b16 %v369, %v368
      %386 = vmatpush.bf16.msra.mxu0 %v377
      %387 = vmatpush.bf16.msra.mxu0 %v376
      %388 = vmatpush.bf16.msra.mxu0 %v375
      %389 = vmatpush.bf16.msra.mxu0 %v374
      %390 = vmatpush.bf16.msra.mxu0 %v373
      %391 = vmatpush.bf16.msra.mxu0 %v372
      %392 = vmatpush.bf16.msra.mxu0 %v371
      %393 = vmatpush.bf16.msra.mxu0 %v370
      %394 = vmatmul.bf16.gmra.mxu0 %v322
      %v395 = vpop.f32.mrf.mxu0
      %v396 = vadd.f32 %v288, %v395
      %v397 = vpop.f32.mrf.mxu0
      %v398 = vadd.f32 %v288, %v397
      %399 = vmatmul.bf16.gmra.mxu0 %v323
      %v400 = vpop.f32.mrf.mxu0
      %v401 = vadd.f32 %v288, %v400
      %v402 = vpop.f32.mrf.mxu0
      %v403 = vadd.f32 %v288, %v402
      %404 = vmatmul.bf16.gmra.mxu0 %v324
      %v405 = vpop.f32.mrf.mxu0
      %v406 = vadd.f32 %v288, %v405
      %v407 = vpop.f32.mrf.mxu0
      %v408 = vadd.f32 %v288, %v407
      %409 = vmatmul.bf16.gmra.mxu0 %v325
      %v410 = vpop.f32.mrf.mxu0
      %v411 = vadd.f32 %v288, %v410
      %v412 = vpop.f32.mrf.mxu0
      %v413 = vadd.f32 %v288, %v412
      %414 = vmatmul.bf16.gmra.mxu0 %v326
      %v415 = vpop.f32.mrf.mxu0
      %v416 = vadd.f32 %v288, %v415
      %v417 = vpop.f32.mrf.mxu0
      %v418 = vadd.f32 %v288, %v417
      %419 = vmatmul.bf16.gmra.mxu0 %v327
      %v420 = vpop.f32.mrf.mxu0
      %v421 = vadd.f32 %v288, %v420
      %v422 = vpop.f32.mrf.mxu0
      %v423 = vadd.f32 %v288, %v422
      %424 = vmatmul.bf16.gmra.mxu0 %v328
      %v425 = vpop.f32.mrf.mxu0
      %v426 = vadd.f32 %v288, %v425
      %v427 = vpop.f32.mrf.mxu0
      %v428 = vadd.f32 %v288, %v427
      %429 = vmatmul.bf16.gmra.mxu0 %v329
      %v430 = vpop.f32.mrf.mxu0
      %v431 = vadd.f32 %v288, %v430
      %v432 = vpop.f32.mrf.mxu0
      %v433 = vadd.f32 %v288, %v432
      %434 = vdwg.mxu0
      %v435 = vmax.f32 %v396, 0.0
      %v436 = vmax.f32 %v398, 0.0
      %v437 = vmax.f32 %v401, 0.0
      %v438 = vmax.f32 %v403, 0.0
      %v439 = vmax.f32 %v406, 0.0
      %v440 = vmax.f32 %v408, 0.0
      %v441 = vmax.f32 %v411, 0.0
      %v442 = vmax.f32 %v413, 0.0
      %v443 = vmax.f32 %v416, 0.0
      %v444 = vmax.f32 %v418, 0.0
      %v445 = vmax.f32 %v421, 0.0
      %v446 = vmax.f32 %v423, 0.0
      %v447 = vmax.f32 %v426, 0.0
      %v448 = vmax.f32 %v428, 0.0
      %v449 = vmax.f32 %v431, 0.0
      %v450 = vmax.f32 %v433, 0.0
      %v451 = vadd.f32 %v435, %v436
      %v452 = vadd.f32 %v451, %v437
      %v453 = vadd.f32 %v452, %v438
      %v454 = vadd.f32 %v453, %v439
      %v455 = vadd.f32 %v454, %v440
      %v456 = vadd.f32 %v455, %v441
      %v457 = vadd.f32 %v456, %v442
      %v458 = vadd.f32 %v457, %v443
      %v459 = vadd.f32 %v458, %v444
      %v460 = vadd.f32 %v459, %v445
      %v461 = vadd.f32 %v460, %v446
      %v462 = vadd.f32 %v461, %v447
      %v463 = vadd.f32 %v462, %v448
      %v464 = vadd.f32 %v463, %v449
      %v465 = vadd.f32 %v464, %v450
      %v466 = vrot.slane %v465, 4
      %v467 = vadd.f32 %v465, %v466
      %v468 = vrot.slane %v467, 2
      %v469 = vadd.f32 %v467, %v468
      %v470 = vrot.slane %v469, 1
      %v471 = vadd.f32 %v469, %v470
      %v472 = vadd.f32 %v264, %v471
    $region41: #{dual_branch_forward.1} parent=1 // loop_footer
      %s263 = sadd.s32 1, %s259
    $region42: #{dual_branch_forward.1} parent=1 // loop_footer_branch
      %258 = sbr.rel target = $region38
    $region43: #{dual_branch_forward.1} parent=1 // loop_exit
      _
    %vm473 = vcmask 1040384
    %v474 = vsel %vm473, %v50, %v264
    %v475 = vpack.c.bf16 %v474, %v474
    %v476 = vld [vmem:[%s3] sm:$0xff]
    %v477 = vld [vmem:[%s3 + $0x8] sm:$0xff]
    %v478 = vld [vmem:[%s3 + $0x10] sm:$0xff]
    %v479 = vld [vmem:[%s3 + $0x18] sm:$0xff]
    %v480 = vld [vmem:[%s3 + $0x20] sm:$0xff]
    %v481 = vld [vmem:[%s3 + $0x28] sm:$0xff]
    %v482 = vld [vmem:[%s3 + $0x30] sm:$0xff]
    %v483 = vld [vmem:[%s3 + $0x38] sm:$0xff]
    %v484 = vld [vmem:[%s3 + $0x40] sm:$0xff]
    %v485 = vld [vmem:[%s3 + $0x48] sm:$0xff]
    %v486 = vld [vmem:[%s3 + $0x50] sm:$0xff]
    %v487 = vld [vmem:[%s3 + $0x58] sm:$0xff]
    %v488 = vld [vmem:[%s3 + $0x60] sm:$0xff]
    %v489 = vld [vmem:[%s3 + $0x68] sm:$0xff]
    %v490 = vld [vmem:[%s3 + $0x70] sm:$0xff]
    %v491 = vld [vmem:[%s3 + $0x78] sm:$0xff]
    %v492 = vld [vmem:[%s3 + $0x80] sm:$0xff]
    %v493 = vld [vmem:[%s3 + $0x88] sm:$0xff]
    %v494 = vld [vmem:[%s3 + $0x90] sm:$0xff]
    %v495 = vld [vmem:[%s3 + $0x98] sm:$0xff]
    %v496 = vld [vmem:[%s3 + $0xa0] sm:$0xff]
    %v497 = vld [vmem:[%s3 + $0xa8] sm:$0xff]
    %v498 = vld [vmem:[%s3 + $0xb0] sm:$0xff]
    %v499 = vld [vmem:[%s3 + $0xb8] sm:$0xff]
    %v500 = vld [vmem:[%s3 + $0xc0] sm:$0xff]
    %v501 = vld [vmem:[%s3 + $0xc8] sm:$0xff]
    %v502 = vld [vmem:[%s3 + $0xd0] sm:$0xff]
    %v503 = vld [vmem:[%s3 + $0xd8] sm:$0xff]
    %v504 = vld [vmem:[%s3 + $0xe0] sm:$0xff]
    %v505 = vld [vmem:[%s3 + $0xe8] sm:$0xff]
    %v506 = vld [vmem:[%s3 + $0xf0] sm:$0xff]
    %v507 = vld [vmem:[%s3 + $0xf8] sm:$0xff]
    %v508 = vld [vmem:[%s4] sm:$0xf]
    %v510 = vperm.slane %v508, 0
    %v511 = vperm.slane %v508, 1
    %v512 = vperm.slane %v508, 2
    %v513 = vperm.slane %v508, 3
    %v550 = vunpack.c.l.b16 %v476
    %v551 = vunpack.c.h.b16 %v476
    %v552 = vunpack.c.l.b16 %v477
    %v553 = vunpack.c.h.b16 %v477
    %v554 = vunpack.c.l.b16 %v478
    %v555 = vunpack.c.h.b16 %v478
    %v556 = vunpack.c.l.b16 %v479
    %v557 = vunpack.c.h.b16 %v479
    %v558 = vunpack.c.l.b16 %v480
    %v559 = vunpack.c.h.b16 %v480
    %v560 = vunpack.c.l.b16 %v481
    %v561 = vunpack.c.h.b16 %v481
    %v562 = vunpack.c.l.b16 %v482
    %v563 = vunpack.c.h.b16 %v482
    %v564 = vunpack.c.l.b16 %v483
    %v565 = vunpack.c.h.b16 %v483
    %v566 = vunpack.c.l.b16 %v484
    %v567 = vunpack.c.h.b16 %v484
    %v568 = vunpack.c.l.b16 %v485
    %v569 = vunpack.c.h.b16 %v485
    %v570 = vunpack.c.l.b16 %v486
    %v571 = vunpack.c.h.b16 %v486
    %v572 = vunpack.c.l.b16 %v487
    %v573 = vunpack.c.h.b16 %v487
    %v574 = vunpack.c.l.b16 %v488
    %v575 = vunpack.c.h.b16 %v488
    %v576 = vunpack.c.l.b16 %v489
    %v577 = vunpack.c.h.b16 %v489
    %v578 = vunpack.c.l.b16 %v490
    %v579 = vunpack.c.h.b16 %v490
    %v580 = vunpack.c.l.b16 %v491
    %v581 = vunpack.c.h.b16 %v491
    %v582 = vunpack.c.l.b16 %v492
    %v583 = vunpack.c.h.b16 %v492
    %v584 = vunpack.c.l.b16 %v493
    %v585 = vunpack.c.h.b16 %v493
    %v586 = vunpack.c.l.b16 %v494
    %v587 = vunpack.c.h.b16 %v494
    %v588 = vunpack.c.l.b16 %v495
    %v589 = vunpack.c.h.b16 %v495
    %v590 = vunpack.c.l.b16 %v496
    %v591 = vunpack.c.h.b16 %v496
    %v592 = vunpack.c.l.b16 %v497
    %v593 = vunpack.c.h.b16 %v497
    %v594 = vunpack.c.l.b16 %v498
    %v595 = vunpack.c.h.b16 %v498
    %v596 = vunpack.c.l.b16 %v499
    %v597 = vunpack.c.h.b16 %v499
    %v598 = vunpack.c.l.b16 %v500
    %v599 = vunpack.c.h.b16 %v500
    %v600 = vunpack.c.l.b16 %v501
    %v601 = vunpack.c.h.b16 %v501
    %v602 = vunpack.c.l.b16 %v502
    %v603 = vunpack.c.h.b16 %v502
    %v604 = vunpack.c.l.b16 %v503
    %v605 = vunpack.c.h.b16 %v503
    %v606 = vunpack.c.l.b16 %v504
    %v607 = vunpack.c.h.b16 %v504
    %v608 = vunpack.c.l.b16 %v505
    %v609 = vunpack.c.h.b16 %v505
    %v610 = vunpack.c.l.b16 %v506
    %v611 = vunpack.c.h.b16 %v506
    %v612 = vunpack.c.l.b16 %v507
    %v613 = vunpack.c.h.b16 %v507
    %v614 = vpack.c.b16 %v554, %v550
    %v615 = vpack.c.b16 %v555, %v551
    %v616 = vpack.c.b16 %v556, %v552
    %v617 = vpack.c.b16 %v557, %v553
    %v618 = vpack.c.b16 %v562, %v558
    %v619 = vpack.c.b16 %v563, %v559
    %v620 = vpack.c.b16 %v564, %v560
    %v621 = vpack.c.b16 %v565, %v561
    %v622 = vpack.c.b16 %v570, %v566
    %v623 = vpack.c.b16 %v571, %v567
    %v624 = vpack.c.b16 %v572, %v568
    %v625 = vpack.c.b16 %v573, %v569
    %v626 = vpack.c.b16 %v578, %v574
    %v627 = vpack.c.b16 %v579, %v575
    %v628 = vpack.c.b16 %v580, %v576
    %v629 = vpack.c.b16 %v581, %v577
    %v630 = vpack.c.b16 %v586, %v582
    %v631 = vpack.c.b16 %v587, %v583
    %v632 = vpack.c.b16 %v588, %v584
    %v633 = vpack.c.b16 %v589, %v585
    %v634 = vpack.c.b16 %v594, %v590
    %v635 = vpack.c.b16 %v595, %v591
    %v636 = vpack.c.b16 %v596, %v592
    %v637 = vpack.c.b16 %v597, %v593
    %v638 = vpack.c.b16 %v602, %v598
    %v639 = vpack.c.b16 %v603, %v599
    %v640 = vpack.c.b16 %v604, %v600
    %v641 = vpack.c.b16 %v605, %v601
    %v642 = vpack.c.b16 %v610, %v606
    %v643 = vpack.c.b16 %v611, %v607
    %v644 = vpack.c.b16 %v612, %v608
    %v645 = vpack.c.b16 %v613, %v609
    %678 = vmatpush.bf16.msra.mxu0 %v642
    %679 = vmatpush.bf16.msra.mxu0 %v638
    %680 = vmatpush.bf16.msra.mxu0 %v634
    %681 = vmatpush.bf16.msra.mxu0 %v630
    %682 = vmatpush.bf16.msra.mxu0 %v626
    %683 = vmatpush.bf16.msra.mxu0 %v622
    %684 = vmatpush.bf16.msra.mxu0 %v618
    %685 = vmatpush.bf16.msra.mxu0 %v614
    %686 = vmatmul.bf16.gmra.mxu0 %v475
    %v687 = vpop.f32.mrf.mxu0
    %v688 = vadd.f32 %v510, %v687
    %v689 = vpop.f32.mrf.mxu0
    %690 = vdwg.mxu0
    %691 = vmatpush.bf16.msra.mxu0 %v643
    %692 = vmatpush.bf16.msra.mxu0 %v639
    %693 = vmatpush.bf16.msra.mxu0 %v635
    %694 = vmatpush.bf16.msra.mxu0 %v631
    %695 = vmatpush.bf16.msra.mxu0 %v627
    %696 = vmatpush.bf16.msra.mxu0 %v623
    %697 = vmatpush.bf16.msra.mxu0 %v619
    %698 = vmatpush.bf16.msra.mxu0 %v615
    %699 = vmatmul.bf16.gmra.mxu0 %v475
    %v700 = vpop.f32.mrf.mxu0
    %v701 = vadd.f32 %v511, %v700
    %v702 = vpop.f32.mrf.mxu0
    %703 = vdwg.mxu0
    %704 = vmatpush.bf16.msra.mxu0 %v644
    %705 = vmatpush.bf16.msra.mxu0 %v640
    %706 = vmatpush.bf16.msra.mxu0 %v636
    %707 = vmatpush.bf16.msra.mxu0 %v632
    %708 = vmatpush.bf16.msra.mxu0 %v628
    %709 = vmatpush.bf16.msra.mxu0 %v624
    %710 = vmatpush.bf16.msra.mxu0 %v620
    %711 = vmatpush.bf16.msra.mxu0 %v616
    %712 = vmatmul.bf16.gmra.mxu0 %v475
    %v713 = vpop.f32.mrf.mxu0
    %v714 = vadd.f32 %v512, %v713
    %v715 = vpop.f32.mrf.mxu0
    %716 = vdwg.mxu0
    %717 = vmatpush.bf16.msra.mxu0 %v645
    %718 = vmatpush.bf16.msra.mxu0 %v641
    %719 = vmatpush.bf16.msra.mxu0 %v637
    %720 = vmatpush.bf16.msra.mxu0 %v633
    %721 = vmatpush.bf16.msra.mxu0 %v629
    %722 = vmatpush.bf16.msra.mxu0 %v625
    %723 = vmatpush.bf16.msra.mxu0 %v621
    %724 = vmatpush.bf16.msra.mxu0 %v617
    %725 = vmatmul.bf16.gmra.mxu0 %v475
    %v726 = vpop.f32.mrf.mxu0
    %v727 = vadd.f32 %v513, %v726
    %v728 = vpop.f32.mrf.mxu0
    %729 = vdwg.mxu0
    %v730 = vmax.f32 %v688, 0.0
    %v731 = vmax.f32 %v701, 0.0
    %v732 = vmax.f32 %v714, 0.0
    %v733 = vmax.f32 %v727, 0.0
    %v734 = vpack.c.bf16 %v730, %v730
    %v735 = vpack.c.bf16 %v731, %v731
    %v736 = vpack.c.bf16 %v732, %v732
    %v737 = vpack.c.bf16 %v733, %v733
    %v738 = vld [vmem:[%s5] sm:$0xf]
    %v739 = vld [vmem:[%s5 + $0x4] sm:$0xf]
    %v740 = vld [vmem:[%s5 + $0x8] sm:$0xf]
    %v741 = vld [vmem:[%s5 + $0xc] sm:$0xf]
    %v742 = vld [vmem:[%s5 + $0x10] sm:$0xf]
    %v743 = vld [vmem:[%s5 + $0x14] sm:$0xf]
    %v744 = vld [vmem:[%s5 + $0x18] sm:$0xf]
    %v745 = vld [vmem:[%s5 + $0x1c] sm:$0xf]
    %v746 = vld [vmem:[%s5 + $0x20] sm:$0xf]
    %v747 = vld [vmem:[%s5 + $0x24] sm:$0xf]
    %v748 = vld [vmem:[%s5 + $0x28] sm:$0xf]
    %v749 = vld [vmem:[%s5 + $0x2c] sm:$0xf]
    %v750 = vld [vmem:[%s5 + $0x30] sm:$0xf]
    %v751 = vld [vmem:[%s5 + $0x34] sm:$0xf]
    %v752 = vld [vmem:[%s5 + $0x38] sm:$0xf]
    %v753 = vld [vmem:[%s5 + $0x3c] sm:$0xf]
    %v754 = vld [vmem:[%s5 + $0x40] sm:$0xf]
    %v755 = vld [vmem:[%s5 + $0x44] sm:$0xf]
    %v756 = vld [vmem:[%s5 + $0x48] sm:$0xf]
    %v757 = vld [vmem:[%s5 + $0x4c] sm:$0xf]
    %v758 = vld [vmem:[%s5 + $0x50] sm:$0xf]
    %v759 = vld [vmem:[%s5 + $0x54] sm:$0xf]
    %v760 = vld [vmem:[%s5 + $0x58] sm:$0xf]
    %v761 = vld [vmem:[%s5 + $0x5c] sm:$0xf]
    %v762 = vld [vmem:[%s5 + $0x60] sm:$0xf]
    %v763 = vld [vmem:[%s5 + $0x64] sm:$0xf]
    %v764 = vld [vmem:[%s5 + $0x68] sm:$0xf]
    %v765 = vld [vmem:[%s5 + $0x6c] sm:$0xf]
    %v766 = vld [vmem:[%s5 + $0x70] sm:$0xf]
    %v767 = vld [vmem:[%s5 + $0x74] sm:$0xf]
    %v768 = vld [vmem:[%s5 + $0x78] sm:$0xf]
    %v769 = vld [vmem:[%s5 + $0x7c] sm:$0xf]
    %v770 = vld [vmem:[%s5 + $0x80] sm:$0xf]
    %v771 = vld [vmem:[%s5 + $0x84] sm:$0xf]
    %v772 = vld [vmem:[%s5 + $0x88] sm:$0xf]
    %v773 = vld [vmem:[%s5 + $0x8c] sm:$0xf]
    %v774 = vld [vmem:[%s5 + $0x90] sm:$0xf]
    %v775 = vld [vmem:[%s5 + $0x94] sm:$0xf]
    %v776 = vld [vmem:[%s5 + $0x98] sm:$0xf]
    %v777 = vld [vmem:[%s5 + $0x9c] sm:$0xf]
    %v778 = vld [vmem:[%s5 + $0xa0] sm:$0xf]
    %v779 = vld [vmem:[%s5 + $0xa4] sm:$0xf]
    %v780 = vld [vmem:[%s5 + $0xa8] sm:$0xf]
    %v781 = vld [vmem:[%s5 + $0xac] sm:$0xf]
    %v782 = vld [vmem:[%s5 + $0xb0] sm:$0xf]
    %v783 = vld [vmem:[%s5 + $0xb4] sm:$0xf]
    %v784 = vld [vmem:[%s5 + $0xb8] sm:$0xf]
    %v785 = vld [vmem:[%s5 + $0xbc] sm:$0xf]
    %v786 = vld [vmem:[%s5 + $0xc0] sm:$0xf]
    %v787 = vld [vmem:[%s5 + $0xc4] sm:$0xf]
    %v788 = vld [vmem:[%s5 + $0xc8] sm:$0xf]
    %v789 = vld [vmem:[%s5 + $0xcc] sm:$0xf]
    %v790 = vld [vmem:[%s5 + $0xd0] sm:$0xf]
    %v791 = vld [vmem:[%s5 + $0xd4] sm:$0xf]
    %v792 = vld [vmem:[%s5 + $0xd8] sm:$0xf]
    %v793 = vld [vmem:[%s5 + $0xdc] sm:$0xf]
    %v794 = vld [vmem:[%s5 + $0xe0] sm:$0xf]
    %v795 = vld [vmem:[%s5 + $0xe4] sm:$0xf]
    %v796 = vld [vmem:[%s5 + $0xe8] sm:$0xf]
    %v797 = vld [vmem:[%s5 + $0xec] sm:$0xf]
    %v798 = vld [vmem:[%s5 + $0xf0] sm:$0xf]
    %v799 = vld [vmem:[%s5 + $0xf4] sm:$0xf]
    %v800 = vld [vmem:[%s5 + $0xf8] sm:$0xf]
    %v801 = vld [vmem:[%s5 + $0xfc] sm:$0xf]
    %v802 = vld [vmem:[%s6] sm:$0x1]
    %v804 = vperm.slane %v802, 0
    %v870 = vunpack.c.l.b16 %v738
    %v871 = vunpack.c.l.b16 %v739
    %v872 = vunpack.c.l.b16 %v740
    %v873 = vunpack.c.l.b16 %v741
    %v874 = vunpack.c.l.b16 %v742
    %v875 = vunpack.c.l.b16 %v743
    %v876 = vunpack.c.l.b16 %v744
    %v877 = vunpack.c.l.b16 %v745
    %v878 = vunpack.c.l.b16 %v746
    %v879 = vunpack.c.l.b16 %v747
    %v880 = vunpack.c.l.b16 %v748
    %v881 = vunpack.c.l.b16 %v749
    %v882 = vunpack.c.l.b16 %v750
    %v883 = vunpack.c.l.b16 %v751
    %v884 = vunpack.c.l.b16 %v752
    %v885 = vunpack.c.l.b16 %v753
    %v886 = vunpack.c.l.b16 %v754
    %v887 = vunpack.c.l.b16 %v755
    %v888 = vunpack.c.l.b16 %v756
    %v889 = vunpack.c.l.b16 %v757
    %v890 = vunpack.c.l.b16 %v758
    %v891 = vunpack.c.l.b16 %v759
    %v892 = vunpack.c.l.b16 %v760
    %v893 = vunpack.c.l.b16 %v761
    %v894 = vunpack.c.l.b16 %v762
    %v895 = vunpack.c.l.b16 %v763
    %v896 = vunpack.c.l.b16 %v764
    %v897 = vunpack.c.l.b16 %v765
    %v898 = vunpack.c.l.b16 %v766
    %v899 = vunpack.c.l.b16 %v767
    %v900 = vunpack.c.l.b16 %v768
    %v901 = vunpack.c.l.b16 %v769
    %v902 = vunpack.c.l.b16 %v770
    %v903 = vunpack.c.l.b16 %v771
    %v904 = vunpack.c.l.b16 %v772
    %v905 = vunpack.c.l.b16 %v773
    %v906 = vunpack.c.l.b16 %v774
    %v907 = vunpack.c.l.b16 %v775
    %v908 = vunpack.c.l.b16 %v776
    %v909 = vunpack.c.l.b16 %v777
    %v910 = vunpack.c.l.b16 %v778
    %v911 = vunpack.c.l.b16 %v779
    %v912 = vunpack.c.l.b16 %v780
    %v913 = vunpack.c.l.b16 %v781
    %v914 = vunpack.c.l.b16 %v782
    %v915 = vunpack.c.l.b16 %v783
    %v916 = vunpack.c.l.b16 %v784
    %v917 = vunpack.c.l.b16 %v785
    %v918 = vunpack.c.l.b16 %v786
    %v919 = vunpack.c.l.b16 %v787
    %v920 = vunpack.c.l.b16 %v788
    %v921 = vunpack.c.l.b16 %v789
    %v922 = vunpack.c.l.b16 %v790
    %v923 = vunpack.c.l.b16 %v791
    %v924 = vunpack.c.l.b16 %v792
    %v925 = vunpack.c.l.b16 %v793
    %v926 = vunpack.c.l.b16 %v794
    %v927 = vunpack.c.l.b16 %v795
    %v928 = vunpack.c.l.b16 %v796
    %v929 = vunpack.c.l.b16 %v797
    %v930 = vunpack.c.l.b16 %v798
    %v931 = vunpack.c.l.b16 %v799
    %v932 = vunpack.c.l.b16 %v800
    %v933 = vunpack.c.l.b16 %v801
    %v934 = vpack.c.b16 %v871, %v870
    %v935 = vpack.c.b16 %v873, %v872
    %v936 = vpack.c.b16 %v875, %v874
    %v937 = vpack.c.b16 %v877, %v876
    %v938 = vpack.c.b16 %v879, %v878
    %v939 = vpack.c.b16 %v881, %v880
    %v940 = vpack.c.b16 %v883, %v882
    %v941 = vpack.c.b16 %v885, %v884
    %v942 = vpack.c.b16 %v887, %v886
    %v943 = vpack.c.b16 %v889, %v888
    %v944 = vpack.c.b16 %v891, %v890
    %v945 = vpack.c.b16 %v893, %v892
    %v946 = vpack.c.b16 %v895, %v894
    %v947 = vpack.c.b16 %v897, %v896
    %v948 = vpack.c.b16 %v899, %v898
    %v949 = vpack.c.b16 %v901, %v900
    %v950 = vpack.c.b16 %v903, %v902
    %v951 = vpack.c.b16 %v905, %v904
    %v952 = vpack.c.b16 %v907, %v906
    %v953 = vpack.c.b16 %v909, %v908
    %v954 = vpack.c.b16 %v911, %v910
    %v955 = vpack.c.b16 %v913, %v912
    %v956 = vpack.c.b16 %v915, %v914
    %v957 = vpack.c.b16 %v917, %v916
    %v958 = vpack.c.b16 %v919, %v918
    %v959 = vpack.c.b16 %v921, %v920
    %v960 = vpack.c.b16 %v923, %v922
    %v961 = vpack.c.b16 %v925, %v924
    %v962 = vpack.c.b16 %v927, %v926
    %v963 = vpack.c.b16 %v929, %v928
    %v964 = vpack.c.b16 %v931, %v930
    %v965 = vpack.c.b16 %v933, %v932
    %998 = vmatpush.bf16.msra.mxu0 %v941
    %999 = vmatpush.bf16.msra.mxu0 %v940
    %1000 = vmatpush.bf16.msra.mxu0 %v939
    %1001 = vmatpush.bf16.msra.mxu0 %v938
    %1002 = vmatpush.bf16.msra.mxu0 %v937
    %1003 = vmatpush.bf16.msra.mxu0 %v936
    %1004 = vmatpush.bf16.msra.mxu0 %v935
    %1005 = vmatpush.bf16.msra.mxu0 %v934
    %1006 = vmatmul.bf16.gmra.mxu0 %v734
    %v1007 = vpop.f32.mrf.mxu0
    %v1008 = vadd.f32 %v804, %v1007
    %v1009 = vpop.f32.mrf.mxu0
    %1010 = vdwg.mxu0
    %1011 = vmatpush.bf16.msra.mxu0 %v949
    %1012 = vmatpush.bf16.msra.mxu0 %v948
    %1013 = vmatpush.bf16.msra.mxu0 %v947
    %1014 = vmatpush.bf16.msra.mxu0 %v946
    %1015 = vmatpush.bf16.msra.mxu0 %v945
    %1016 = vmatpush.bf16.msra.mxu0 %v944
    %1017 = vmatpush.bf16.msra.mxu0 %v943
    %1018 = vmatpush.bf16.msra.mxu0 %v942
    %1019 = vmatmul.bf16.gmra.mxu0 %v735
    %v1020 = vpop.f32.mrf.mxu0
    %v1021 = vadd.f32 %v1008, %v1020
    %v1022 = vpop.f32.mrf.mxu0
    %1023 = vdwg.mxu0
    %1024 = vmatpush.bf16.msra.mxu0 %v957
    %1025 = vmatpush.bf16.msra.mxu0 %v956
    %1026 = vmatpush.bf16.msra.mxu0 %v955
    %1027 = vmatpush.bf16.msra.mxu0 %v954
    %1028 = vmatpush.bf16.msra.mxu0 %v953
    %1029 = vmatpush.bf16.msra.mxu0 %v952
    %1030 = vmatpush.bf16.msra.mxu0 %v951
    %1031 = vmatpush.bf16.msra.mxu0 %v950
    %1032 = vmatmul.bf16.gmra.mxu0 %v736
    %v1033 = vpop.f32.mrf.mxu0
    %v1034 = vadd.f32 %v1021, %v1033
    %v1035 = vpop.f32.mrf.mxu0
    %1036 = vdwg.mxu0
    %1037 = vmatpush.bf16.msra.mxu0 %v965
    %1038 = vmatpush.bf16.msra.mxu0 %v964
    %1039 = vmatpush.bf16.msra.mxu0 %v963
    %1040 = vmatpush.bf16.msra.mxu0 %v962
    %1041 = vmatpush.bf16.msra.mxu0 %v961
    %1042 = vmatpush.bf16.msra.mxu0 %v960
    %1043 = vmatpush.bf16.msra.mxu0 %v959
    %1044 = vmatpush.bf16.msra.mxu0 %v958
    %1045 = vmatmul.bf16.gmra.mxu0 %v737
    %v1046 = vpop.f32.mrf.mxu0
    %v1047 = vadd.f32 %v1034, %v1046
    %v1048 = vpop.f32.mrf.mxu0
    %1049 = vdwg.mxu0
    %vm1050 = vcmask 58368
    %1051 = vst.msk [vmem:[#allocation2] sm:$0x3] %vm1050, %v1047
    // Predicated region
    $region44: #{dual_branch_forward.1} parent=1 // pred_check
      _
    $region45: #{dual_branch_forward.1} parent=1 // pred_check_branch
      %1053 = sbr.rel (0) target = $region47
    $region46: #{dual_branch_forward.1} parent=1 // pred_region
      %1055 = vsyncadd [#allocation3], 0
      %s1057 = sshll.u32 [#allocation2], 4
      %s1058 = int_to_ptr.vmem [resolvable:$true] %s1057
      %s1059 = sshll.u32 %s7, 4
      %s1060 = int_to_ptr.hbm [resolvable:$true] %s1059
      %1062 = dma.vmem_to_hbm [thread:$0]  %s1058, 32, %s1060, [#allocation3]
    $region47: #{dual_branch_forward.1} parent=1 // pred_fallthru
      _
    // Predicated region
    $region48: #{dual_branch_forward.1} parent=1 // pred_check
      _
    $region49: #{dual_branch_forward.1} parent=1 // pred_check_branch
      %1064 = sbr.rel (0) target = $region51
    $region50: #{dual_branch_forward.1} parent=1 // pred_region
      %1066 = dma.done [#allocation3], 32
    $region51: #{dual_branch_forward.1} parent=1 // pred_fallthru
      _
    %1067 = vsyncpa [#allocation3], 1

</llo_original>
